<compile_context>
chip_gen: v7x
topology: tpu7x:2x2x1
jax: 0.10.0
libtpu: 0.0.40
codegen_flags: <defaults>
</compile_context>

<pallas_src>
import functools

import jax
import jax.numpy as jnp
from jax.experimental import pallas as pl
from jax.experimental.pallas import tpu as pltpu


_LANE = 128                       # lane-dense last dim -> unmasked vst
_TILE_BYTES = 2 * 1024 * 1024     # ~2 MiB per buffer per stream
_MIN_GRID = 8                     # keep several grid steps for megacore sharding


# ----------------------------- helpers ------------------------------------- #

def _round_up(v, m):
    return ((v + m - 1) // m) * m


def _sublane_multiple(itemsize):
    # native sublane tile height: f32 -> 8, bf16/f16 -> 16, int8/fp8 -> 32
    return max(8, 32 // max(1, itemsize))


def _choose_tile_rows(rows, itemsize):
    sub = _sublane_multiple(itemsize)
    cap = max(sub, _TILE_BYTES // (_LANE * itemsize))      # ~2 MiB / buffer
    tm = min(cap, max(sub, pl.cdiv(rows, _MIN_GRID)))      # keep grid >= ~8
    if tm >= rows:
        return rows                                        # full extent: always legal
    return max(sub, (tm // sub) * sub)


# ----------------------------- Pallas kernels ------------------------------ #

def _requant_kernel(sc_ref, x_ref, o_ref, *, round_input, lo, hi):
    # sc_ref (SMEM, f32[5]): [inv_a, b, c, inv_ai, bi]
    # round_input=True : out = clip(round(round(x * inv_a) * b), lo, hi) * c
    # round_input=False: out = clip(round(x * b), lo, hi) * c   (x already integer)
    x = x_ref[...].astype(jnp.float32)
    z = jnp.round(x * sc_ref[0]) if round_input else x
    y = jnp.round(z * sc_ref[1])
    o_ref[...] = (jnp.clip(y, lo, hi) * sc_ref[2]).astype(o_ref.dtype)


def _requant_identity_kernel(sc_ref, x_ref, id_ref, o_ref, *,
                             round_input, sum_first, lo, hi):
    # sum_first=True : LSQ fake-quant of (x + identity) with one scale
    #                  (sc[0] = 1/s, sc[2] = s).
    # sum_first=False: FixedPointMul with residual — requantize x and identity
    #                  separately, add, clamp, rescale.
    x = x_ref[...].astype(jnp.float32)
    idn = id_ref[...].astype(jnp.float32)
    if sum_first:
        y = jnp.round((x + idn) * sc_ref[0])
    else:
        zx = jnp.round(x * sc_ref[0]) if round_input else x
        zi = jnp.round(idn * sc_ref[3]) if round_input else idn
        y = jnp.round(zx * sc_ref[1]) + jnp.round(zi * sc_ref[4])
    o_ref[...] = (jnp.clip(y, lo, hi) * sc_ref[2]).astype(o_ref.dtype)


# ------------------------------ JAX wrapper --------------------------------- #

def _requant_pallas(x, identity, scalars, *, round_input, sum_first, lo, hi,
                    donate=False):
    """Fused elementwise fixed-point requantization over an arbitrary-shape tensor."""
    orig_shape = x.shape
    dtype = x.dtype
    itemsize = jnp.dtype(dtype).itemsize
    total = int(x.size)

    xf = x.reshape(-1)                                  # free (contiguous reshape)
    rows = pl.cdiv(total, _LANE)
    pad = 0
    if total % _LANE:
        # Rare: pad only the tiny tail so the slab is lane-dense.
        rows = _round_up(rows, _sublane_multiple(itemsize))
        pad = rows * _LANE - total
        xf = jnp.pad(xf, (0, pad))
    x2d = xf.reshape(rows, _LANE)

    # Scalar requant parameters ride in SMEM: [inv_a, b, c, inv_ai, bi].
    sc = jnp.stack([jnp.asarray(v, dtype=jnp.float32).reshape(()) for v in scalars])

    tm = _choose_tile_rows(rows, itemsize)
    grid = (pl.cdiv(rows, tm),)                 # ragged last tile masked by Pallas
    tile_spec = pl.BlockSpec((tm, _LANE), lambda i: (i, 0))
    smem_spec = pl.BlockSpec(memory_space=pltpu.MemorySpace.SMEM)
    cparams = pltpu.CompilerParams(dimension_semantics=("parallel",))
    out_shape = jax.ShapeDtypeStruct((rows, _LANE), dtype)

    n_streams = 2 if identity is None else 3
    cost = pl.CostEstimate(flops=8 * rows * _LANE * (n_streams - 1),
                           transcendentals=0,
                           bytes_accessed=n_streams * rows * _LANE * itemsize + 20)

    if identity is None:
        kernel = functools.partial(_requant_kernel, round_input=round_input,
                                   lo=float(lo), hi=float(hi))
        out2d = pl.pallas_call(
            kernel, out_shape=out_shape, grid=grid,
            in_specs=[smem_spec, tile_spec], out_specs=tile_spec,
            compiler_params=cparams, cost_estimate=cost,
            input_output_aliases=({1: 0} if donate else {}),
        )(sc, x2d)
    else:
        idn = identity if identity.dtype == dtype else identity.astype(dtype)
        idf = idn.reshape(-1)
        if pad:
            idf = jnp.pad(idf, (0, pad))
        id2d = idf.reshape(rows, _LANE)
        kernel = functools.partial(_requant_identity_kernel, round_input=round_input,
                                   sum_first=sum_first, lo=float(lo), hi=float(hi))
        out2d = pl.pallas_call(
            kernel, out_shape=out_shape, grid=grid,
            in_specs=[smem_spec, tile_spec, tile_spec], out_specs=tile_spec,
            compiler_params=cparams, cost_estimate=cost,
            input_output_aliases=({1: 0} if donate else {}),
        )(sc, x2d, id2d)

    if pad:
        return out2d.reshape(-1)[:total].reshape(orig_shape)
    return out2d.reshape(orig_shape)


class QuantActPallas:
    """Forward-only JAX/Pallas port of QuantAct (LSQ act quant + fixed-point requant)."""

    def __init__(self, activation_bit=8, eval_mode=False):
        self.activation_bit = activation_bit
        self.eval_mode = eval_mode
        self.per_channel = False
        # LsqQuanParam(all_positive=False, symmetric=True)
        self.thd_neg = -2 ** (activation_bit - 1) + 1
        self.thd_pos = 2 ** (activation_bit - 1) - 1
        self.s = jnp.ones((1,), jnp.float32)          # LsqQuanParam.s
        self.initialized = False
        self.init_state = 0
        self.training = True

    def __call__(self, x, quantized_bit, x_scale=None, identity=None,
                 identity_scaling_factor=None, quant_mode=False):
        bit = self.activation_bit

        if not quant_mode:
            x_act = x if identity is None else x + identity
            return x_act, None, bit
        if quantized_bit is not None and quantized_bit == bit and identity is None:
            return x, x_scale, bit

        n = float(self.thd_pos)                       # 2**(bit-1) - 1

        if (not self.training) and self.eval_mode and x_scale is not None:
            # FixedPointMulInference: input is already integer-valued; requantize to self.s.
            s = self.s.reshape(()).astype(jnp.float32)
            b = jnp.asarray(x_scale, jnp.float32).reshape(()) / s
            if identity is None:
                out = _requant_pallas(x, None, (1.0, b, 1.0, 1.0, 0.0),
                                      round_input=False, sum_first=False,
                                      lo=-n, hi=n - 1.0)
            else:
                bi = jnp.asarray(identity_scaling_factor, jnp.float32).reshape(()) / s
                out = _requant_pallas(x, identity, (1.0, b, 1.0, 1.0, bi),
                                      round_input=False, sum_first=False,
                                      lo=-n, hi=n - 1.0)
            return out, self.s, bit

        if self.init_state == 0:
            if not self.initialized:
                # LsqQuanParam.init_from(x_act): s = 2 * mean|x| / sqrt(thd_pos)
                x_act = x if identity is None else x + identity
                self.s = (2.0 * jnp.mean(jnp.abs(x_act.astype(jnp.float32))) /
                          (self.thd_pos ** 0.5)).astype(jnp.float32).reshape(1)
                self.initialized = True
            self.init_state = 1

        s_scale_vec = jnp.maximum(self.s, jnp.float32(1e-5))    # clip(s, 1e-5) fwd value
        s_scale = s_scale_vec.reshape(())

        if x_scale is None:
            # Pure LSQ fake-quant of x_act: clamp(round(x_act / s), thd_neg, thd_pos) * s
            inv_s = 1.0 / s_scale
            out = _requant_pallas(x, identity, (inv_s, 1.0, s_scale, inv_s, 1.0),
                                  round_input=True, sum_first=True,
                                  lo=float(self.thd_neg), hi=float(self.thd_pos))
        else:
            # FixedPointMul: clamp(round(round(x/xs) * (xs/s)) [+ id term], -n, n-1) * s
            xs = jnp.asarray(x_scale, jnp.float32).reshape(())
            if identity is None:
                out = _requant_pallas(x, None,
                                      (1.0 / xs, xs / s_scale, s_scale, 1.0, 0.0),
                                      round_input=True, sum_first=False,
                                      lo=-n, hi=n - 1.0)
            else:
                ids = jnp.asarray(identity_scaling_factor, jnp.float32).reshape(())
                out = _requant_pallas(x, identity,
                                      (1.0 / xs, xs / s_scale, s_scale,
                                       1.0 / ids, ids / s_scale),
                                      round_input=True, sum_first=False,
                                      lo=-n, hi=n - 1.0)
        return out, s_scale_vec, bit


# ---------------------------------- main ------------------------------------ #

if __name__ == "__main__":
    key = jax.random.PRNGKey(0)
    k_x, k_id = jax.random.split(key)

    N, C, H, W = 2, 4, 16, 16
    bit = 8
    n = float(2 ** (bit - 1) - 1)          # 127
    x = jax.random.normal(k_x, (N, C, H, W), dtype=jnp.float32)
    idn = jax.random.normal(k_id, (N, C, H, W), dtype=jnp.float32)
    x_scale = jnp.float32(0.05)
    id_scale = jnp.float32(0.08)

    mod = QuantActPallas(activation_bit=bit, eval_mode=False)

    # ---- path 1: quant_mode, x_scale given, no identity (hot path: FixedPointMul) ----
    out1, sf1, b1 = mod(x, quantized_bit=32, x_scale=x_scale, quant_mode=True)
    out1 = jax.block_until_ready(out1)

    s_init = (2.0 * jnp.mean(jnp.abs(x)) / (n ** 0.5)).astype(jnp.float32)
    s_scale = jnp.maximum(s_init, 1e-5)
    inv_xs = 1.0 / x_scale
    bscale = x_scale / s_scale
    z = jnp.round(x * inv_xs)
    ref1 = jnp.clip(jnp.round(z * bscale), -n, n - 1.0) * s_scale
    assert jnp.allclose(out1, ref1, atol=1e-4, rtol=1e-4), "path1 (FixedPointMul) mismatch"
    assert b1 == bit and sf1.shape == (1,)

    # ---- path 2: quant_mode, x_scale + identity (residual requant) ----
    out2, sf2, _ = mod(x, quantized_bit=32, x_scale=x_scale, identity=idn,
                       identity_scaling_factor=id_scale, quant_mode=True)
    out2 = jax.block_until_ready(out2)
    zi = jnp.round(idn * (1.0 / id_scale))
    ref2 = jnp.clip(jnp.round(z * bscale) + jnp.round(zi * (id_scale / s_scale)),
                    -n, n - 1.0) * s_scale
    assert jnp.allclose(out2, ref2, atol=1e-4, rtol=1e-4), "path2 (identity) mismatch"

    # ---- path 3: quant_mode, x_scale None (pure LSQ fake-quant) ----
    out3, sf3, _ = mod(x, quantized_bit=32, x_scale=None, quant_mode=True)
    out3 = jax.block_until_ready(out3)
    ref3 = jnp.clip(jnp.round(x * (1.0 / s_scale)), -n, n) * s_scale
    assert jnp.allclose(out3, ref3, atol=1e-4, rtol=1e-4), "path3 (LSQ) mismatch"

    # ---- path 4: quant_mode=False passthrough; same-bit shortcut ----
    out4, sf4, _ = mod(x, quantized_bit=None, quant_mode=False)
    assert sf4 is None and jnp.allclose(out4, x)
    out4b, sf4b, _ = mod(x, quantized_bit=bit, x_scale=x_scale, quant_mode=True)
    assert jnp.allclose(out4b, x) and sf4b is x_scale

    # ---- path 5: eval-mode fixed-point requant (FixedPointMulInference) ----
    mod_eval = QuantActPallas(activation_bit=bit, eval_mode=True)
    mod_eval.training = False
    mod_eval.s = jnp.asarray([0.1], jnp.float32)
    x_int = jnp.clip(jnp.round(x * inv_xs), -n, n)        # pre-quantized integer input
    out5, sf5, _ = mod_eval(x_int, quantized_bit=32, x_scale=x_scale, quant_mode=True)
    out5 = jax.block_until_ready(out5)
    ref5 = jnp.clip(jnp.round(x_int * (x_scale / mod_eval.s.reshape(()))), -n, n - 1.0)
    assert jnp.allclose(out5, ref5, atol=1e-4, rtol=1e-4), "path5 (inference) mismatch"
    assert jnp.allclose(sf5, mod_eval.s)

    # ---- path 6: bf16 input with numel % 128 != 0 (native-dtype slab + tiny tail pad) ----
    x_bf = jax.random.normal(k_id, (2, 3, 17, 16), dtype=jnp.float32).astype(jnp.bfloat16)
    mod_bf = QuantActPallas(activation_bit=bit, eval_mode=False)
    out6, sf6, _ = mod_bf(x_bf, quantized_bit=32, x_scale=x_scale, quant_mode=True)
    out6 = jax.block_until_ready(out6)
    assert out6.dtype == jnp.bfloat16 and out6.shape == x_bf.shape
    x_bf32 = x_bf.astype(jnp.float32)
    s6 = jnp.maximum((2.0 * jnp.mean(jnp.abs(x_bf32)) / (n ** 0.5)).astype(jnp.float32), 1e-5)
    z6 = jnp.round(x_bf32 * (1.0 / x_scale))
    ref6 = (jnp.clip(jnp.round(z6 * (x_scale / s6)), -n, n - 1.0) * s6).astype(jnp.bfloat16)
    assert jnp.allclose(out6.astype(jnp.float32), ref6.astype(jnp.float32),
                        atol=1e-2, rtol=1e-2), "path6 (bf16 ragged) mismatch"

    print("KERNEL_OK")
</pallas_src>

<mosaic_0001>
module attributes {stable_mosaic.version = 11 : i64} {
  func.func @_requant_kernel(%arg0: i32, %arg1: memref<5xf32, #tpu.memory_space<smem>>, %arg2: memref<8x128xf32, #tpu.memory_space<vmem>>, %arg3: memref<8x128xf32, #tpu.memory_space<vmem>>) attributes {dimension_semantics = [#tpu.dimension_semantics<parallel>], iteration_bounds = array<i64: 2>, scalar_prefetch = 0 : i64, scratch_operands = 0 : i64, tpu.core_type = #tpu.core_type<tc>, window_params = [{transform_indices = @transform_0, window_bounds = array<i64: 5>}, {transform_indices = @transform_1, window_bounds = array<i64: 8, 128>}, {transform_indices = @transform_2, window_bounds = array<i64: 8, 128>}]} {
    %c0 = arith.constant 0 : index
    %c0_0 = arith.constant 0 : index
    %0 = vector.load %arg2[%c0, %c0_0] : memref<8x128xf32, #tpu.memory_space<vmem>>, vector<8x128xf32>
    %c0_1 = arith.constant 0 : index
    %1 = memref.load %arg1[%c0_1] : memref<5xf32, #tpu.memory_space<smem>>
    %2 = vector.broadcast %1 : f32 to vector<8x128xf32>
    %3 = arith.mulf %0, %2 : vector<8x128xf32>
    %4 = math.roundeven %3 : vector<8x128xf32>
    %c1 = arith.constant 1 : index
    %5 = memref.load %arg1[%c1] : memref<5xf32, #tpu.memory_space<smem>>
    %6 = vector.broadcast %5 : f32 to vector<8x128xf32>
    %7 = arith.mulf %4, %6 : vector<8x128xf32>
    %8 = math.roundeven %7 : vector<8x128xf32>
    %cst = arith.constant -1.270000e+02 : f32
    %cst_2 = arith.constant 1.260000e+02 : f32
    %9 = vector.broadcast %cst : f32 to vector<8x128xf32>
    %10 = arith.maximumf %9, %8 : vector<8x128xf32>
    %11 = vector.broadcast %cst_2 : f32 to vector<8x128xf32>
    %12 = arith.minimumf %11, %10 : vector<8x128xf32>
    %c2 = arith.constant 2 : index
    %13 = memref.load %arg1[%c2] : memref<5xf32, #tpu.memory_space<smem>>
    %14 = vector.broadcast %13 : f32 to vector<8x128xf32>
    %15 = arith.mulf %12, %14 : vector<8x128xf32>
    %c0_3 = arith.constant 0 : index
    %c0_4 = arith.constant 0 : index
    %16 = vector.load %arg3[%c0_3, %c0_4] : memref<8x128xf32, #tpu.memory_space<vmem>>, vector<8x128xf32>
    tpu.vector_store %arg3[%c0_3, %c0_4], %15 {strides = array<i32>} : memref<8x128xf32, #tpu.memory_space<vmem>>, vector<8x128xf32>,
    return
  }
  func.func @transform_0(%arg0: i32) -> i32 {
    %c0_i32 = arith.constant 0 : i32
    %c0_i32_0 = arith.constant 0 : i32
    return %c0_i32 : i32
  }
  func.func @transform_1(%arg0: i32) -> (i32, i32) {
    %c0_i32 = arith.constant 0 : i32
    %c0_i32_0 = arith.constant 0 : i32
    return %arg0, %c0_i32 : i32, i32
  }
  func.func @transform_2(%arg0: i32) -> (i32, i32) {
    %c0_i32 = arith.constant 0 : i32
    %c0_i32_0 = arith.constant 0 : i32
    return %arg0, %c0_i32 : i32, i32
  }
}

</mosaic_0001>

<llo_original>
// kernel: tpu_custom_call.1
$region0: #{tpu_custom_call.1}
  #allocation0 [shape = 'u32[]', space=smem, size = 0x4, offset = 0x4, fixed_abs, tag = 'smem constant byte address 0x4 - core index']
  #allocation1 [shape = 'u32[144,128]{1,0:T(1,128)}', space=vmem, size = 0x12000, scoped, tag = 'internal scratch']
  %s0 = inlined_call_operand.hbm [shape: f32[5], index: 0, kind: input, shape index: {}]
  %s1 = inlined_call_operand.hbm [shape: f32[16,128], index: 1, kind: input, shape index: {}]
  %s2 = inlined_call_operand.hbm [shape: f32[16,128], index: 2, kind: output, shape index: {}]
  %s3 = sld [smem:[#allocation0]]
  $region49: #{tpu_custom_call.1} parent=0
    _
  %s5 = ssub.s32 1, %s3
  %s6 = scalar_select 0, %s5, %s3
  $region1: #{tpu_custom_call.1} parent=0
    #allocation2 [shape = 'u8[512]{0}', space=smem, size = 0x200, scoped, tag = 'input window, operand 0, single buffered']
    #allocation3 [shape = 's32[2]{0}', space=sflag, size = 0x8, scoped, tag = 'scoped memory for tpu_custom_call.1']
    #allocation4 [shape = 's32[2]{0}', space=sflag, size = 0x8, scoped, tag = 'scoped memory for tpu_custom_call.1']
    #allocation5 [shape = 's32[2]{0}', space=sflag, size = 0x8, scoped, tag = 'scoped memory for tpu_custom_call.1']
    #allocation6 [shape = 'u8[8192]{0}', space=vmem, size = 0x2000, scoped, tag = 'input window, operand 1']
    #allocation7 [shape = 'u8[8192]{0}', space=vmem, size = 0x2000, scoped, tag = 'output window, operand 0']
    %7 = vsyncpa [#allocation5], 0
    %8 = vsyncpa [#allocation3], 0
    %s9 = scalar_lea.sflag [#allocation3], 1
    %10 = vsyncpa %s9, 0
    %11 = vsyncpa [#allocation4], 0
    %s12 = scalar_lea.sflag [#allocation4], 1
    %13 = vsyncpa %s12, 0
    loop: start=0, step=1, limit=4
    $region2: #{tpu_custom_call.1} parent=1 // loop_pre_header
      _
    $region3: #{tpu_custom_call.1} parent=1 // loop_header
      %s15 = sphi 0, %s19
      %p16 = scmp.ge.s32.totalorder %s15, 4
      %s23 = sphi 0, %s23
      %s25 = sphi 0, %s23
      %s26 = sphi 0, %s25
      %s40 = sphi 0, %s26
      %s46 = sphi 0, %s48
      %s49 = sphi 0, %s46
      %s50 = sphi 0, %s49
      %s66 = sphi 0, %s50
      %s72 = sphi 0, %s74
      %s75 = sphi 0, %s72
      %s76 = sphi 0, %s75
      %s92 = sphi 0, %s76
    $region4: #{tpu_custom_call.1} parent=1 // loop_header_branch
      %18 = sbr.rel (%p16) target = $region8
    $region5: #{tpu_custom_call.1} parent=1 // loop_body
      %s20 = ssub.s32 %s15, 1
      %s21 = ssub.s32 %s15, 2
      %s22 = sadd.s32 %s15, 1
      %s24 = sadd.s32 %s23, 1
      %p27 = scmp.eq.s32.totalorder %s15, 1
      %p28 = scmp.ne.s32.totalorder %s23, %s25
      %p29 = scmp.eq.s32.totalorder %s15, 0
      %p30 = por %p28, %p29
      %p31 = scmp.ne.s32.totalorder %s23, %s25
      %p32 = scmp.eq.s32.totalorder %s20, 1
      %p33 = por %p31, %p32
      %p34 = scmp.ne.s32.totalorder %s25, %s26
      %p35 = scmp.eq.s32.totalorder %s20, 0
      %p36 = por %p34, %p35
      %p37 = scmp.ne.s32.totalorder %s25, %s26
      %p38 = scmp.eq.s32.totalorder %s21, 1
      %p39 = por %p37, %p38
      %p41 = scmp.ne.s32.totalorder %s26, %s40
      %p42 = scmp.eq.s32.totalorder %s21, 0
      %p43 = por %p41, %p42
      %s44 = ssub.s32 %s15, %s22
      %p45 = scmp.eq.s32.totalorder %s44, 0
      %s47 = sadd.s32 %s46, 1
      %s48 = scalar_select %p45, %s46, %s47
      %p51 = pneg %p45
      %p52 = scmp.eq.s32.totalorder %s15, 1
      %p53 = por %p51, %p52
      %p54 = scmp.ne.s32.totalorder %s46, %s49
      %p55 = scmp.eq.s32.totalorder %s15, 0
      %p56 = por %p54, %p55
      %p57 = scmp.ne.s32.totalorder %s46, %s49
      %p58 = scmp.eq.s32.totalorder %s20, 1
      %p59 = por %p57, %p58
      %p60 = scmp.ne.s32.totalorder %s49, %s50
      %p61 = scmp.eq.s32.totalorder %s20, 0
      %p62 = por %p60, %p61
      %p63 = scmp.ne.s32.totalorder %s49, %s50
      %p64 = scmp.eq.s32.totalorder %s21, 1
      %p65 = por %p63, %p64
      %p67 = scmp.ne.s32.totalorder %s50, %s66
      %p68 = scmp.eq.s32.totalorder %s21, 0
      %p69 = por %p67, %p68
      %s70 = ssub.s32 %s15, %s22
      %p71 = scmp.eq.s32.totalorder %s70, 0
      %s73 = sadd.s32 %s72, 1
      %s74 = scalar_select %p71, %s72, %s73
      %p77 = pneg %p71
      %p78 = scmp.eq.s32.totalorder %s15, 1
      %p79 = por %p77, %p78
      %p80 = scmp.ne.s32.totalorder %s72, %s75
      %p81 = scmp.eq.s32.totalorder %s15, 0
      %p82 = por %p80, %p81
      %p83 = scmp.ne.s32.totalorder %s72, %s75
      %p84 = scmp.eq.s32.totalorder %s20, 1
      %p85 = por %p83, %p84
      %p86 = scmp.ne.s32.totalorder %s75, %s76
      %p87 = scmp.eq.s32.totalorder %s20, 0
      %p88 = por %p86, %p87
      %p89 = scmp.ne.s32.totalorder %s75, %s76
      %p90 = scmp.eq.s32.totalorder %s21, 1
      %p91 = por %p89, %p90
      %p93 = scmp.ne.s32.totalorder %s76, %s92
      %p94 = scmp.eq.s32.totalorder %s21, 0
      %p95 = por %p93, %p94
      %p96 = scmp.le.s32.totalorder 1, %s15
      %p97 = scmp.lt.s32.totalorder %s15, 3
      %p98 = pnand %p96, %p97
      %p99 = pneg %p98
      // Predicated region
      $region9: #{tpu_custom_call.1} parent=5 // pred_check
        _
      $region10: #{tpu_custom_call.1} parent=5 // pred_check_branch
        %101 = sbr.rel (%p98) target = $region12
      $region11: #{tpu_custom_call.1} parent=5 // pred_region
        %s102 = ssub.s32 %s15, 1
        // Predicated region
        $region13: #{tpu_custom_call.1} parent=11 // pred_check
          %p103 = pneg %p36
        $region14: #{tpu_custom_call.1} parent=11 // pred_check_branch
          %105 = sbr.rel (%p103) target = $region16
        $region15: #{tpu_custom_call.1} parent=11 // pred_region
          %s107 = ssub.s32 16, 16
          %108 = vsyncadd [#allocation5], %s107
          %111 = dma.hbm_to_smem %s0, 16, [#allocation2], [#allocation5]
        $region16: #{tpu_custom_call.1} parent=11 // pred_fallthru
          _
      $region12: #{tpu_custom_call.1} parent=5 // pred_fallthru
        _
      %p112 = scmp.lt.s32.totalorder %s15, 2
      // Predicated region
      $region17: #{tpu_custom_call.1} parent=5 // pred_check
        %p113 = pneg %p112
      $region18: #{tpu_custom_call.1} parent=5 // pred_check_branch
        %115 = sbr.rel (%p113) target = $region20
      $region19: #{tpu_custom_call.1} parent=5 // pred_region
        // Predicated region
        $region21: #{tpu_custom_call.1} parent=19 // pred_check
          %p116 = pneg %p56
        $region22: #{tpu_custom_call.1} parent=19 // pred_check_branch
          %118 = sbr.rel (%p116) target = $region24
        $region23: #{tpu_custom_call.1} parent=19 // pred_region
          %s119 = sand.u32 %s46, 1
          %s120 = scalar_lea.sflag [#allocation3], %s119
          %s121 = sand.u32 %s46, 1
          %s122 = smul.addr %s121, 8
          %s123 = scalar_lea.vmem [#allocation6], %s122
          %s125 = ssub.s32 128, 128
          %126 = vsyncadd %s120, %s125
          %s127 = smul.addr %s15, 128
          %s128 = scalar_lea.hbm %s1, %s127
          %s130 = sshll.u32 %s123, 4
          %s131 = int_to_ptr.vmem [resolvable:$true] %s130
          %133 = dma.hbm_to_vmem [thread:$0]  %s128, 128, %s131, %s120
        $region24: #{tpu_custom_call.1} parent=19 // pred_fallthru
          _
      $region20: #{tpu_custom_call.1} parent=5 // pred_fallthru
        _
      %p134 = scmp.le.s32.totalorder 1, %s15
      %p135 = scmp.lt.s32.totalorder %s15, 3
      %p136 = pnand %p134, %p135
      %p137 = pneg %p136
      // Predicated region
      $region25: #{tpu_custom_call.1} parent=5 // pred_check
        _
      $region26: #{tpu_custom_call.1} parent=5 // pred_check_branch
        %139 = sbr.rel (%p136) target = $region28
      $region27: #{tpu_custom_call.1} parent=5 // pred_region
        %s140 = ssub.s32 %s15, 1
        // Predicated region
        $region29: #{tpu_custom_call.1} parent=27 // pred_check
          %p141 = pneg %p36
        $region30: #{tpu_custom_call.1} parent=27 // pred_check_branch
          %143 = sbr.rel (%p141) target = $region32
        $region31: #{tpu_custom_call.1} parent=27 // pred_region
          %144 = dma.done [#allocation5], 16
        $region32: #{tpu_custom_call.1} parent=27 // pred_fallthru
          _
        %s145 = sand.u32 %s49, 1
        %s146 = scalar_lea.sflag [#allocation3], %s145
        %s147 = sand.u32 %s49, 1
        %s148 = smul.addr %s147, 8
        %s149 = scalar_lea.vmem [#allocation6], %s148
        // Predicated region
        $region33: #{tpu_custom_call.1} parent=27 // pred_check
          %p150 = pneg %p62
        $region34: #{tpu_custom_call.1} parent=27 // pred_check_branch
          %152 = sbr.rel (%p150) target = $region36
        $region35: #{tpu_custom_call.1} parent=27 // pred_region
          %153 = dma.done %s146, 128
        $region36: #{tpu_custom_call.1} parent=27 // pred_fallthru
          _
        %154 = sfence
        %p155 = pneg %p36
        %p156 = pneg %p33
        %s157 = sand.u32 %s49, 1
        %s158 = scalar_lea.sflag [#allocation3], %s157
        %s159 = sand.u32 %s49, 1
        %s160 = smul.addr %s159, 8
        %s161 = scalar_lea.vmem [#allocation6], %s160
        %p162 = pneg %p62
        %p163 = pneg %p59
        %p164 = pneg %p88
        %p165 = pneg %p85
        %s166 = sand.u32 %s75, 1
        %s167 = scalar_lea.sflag [#allocation4], %s166
        %s168 = sand.u32 %s75, 1
        %s169 = smul.addr %s168, 8
        %s170 = scalar_lea.vmem [#allocation7], %s169
        %v171 = vld [vmem:[%s149] sm:$0xff]
        %s172 = sld [smem:[#allocation2]]
        %v173 = vstv %s172
        %v174 = vmul.f32 %v171, %v173
        %v175 = vround.ne.pseudo %v174
        %s176 = sld [smem:[#allocation2 + $0x1]]
        %v177 = vstv %s176
        %v178 = vmul.f32 %v175, %v177
        %v179 = vround.ne.pseudo %v178
        %v180 = vmax.f32 %v179, -127.0
        %v181 = vmin.f32 %v180, 126.0
        %s182 = sld [smem:[#allocation2 + $0x2]]
        %v183 = vstv %s182
        %v184 = vmul.f32 %v181, %v183
        %185 = vst [vmem:[%s170] sm:$0xff] %v184
        %s186 = sand.u32 %s75, 1
        %s187 = scalar_lea.sflag [#allocation4], %s186
        %s188 = sand.u32 %s75, 1
        %s189 = smul.addr %s188, 8
        %s190 = scalar_lea.vmem [#allocation7], %s189
        // Predicated region
        $region37: #{tpu_custom_call.1} parent=27 // pred_check
          %p191 = pneg %p85
        $region38: #{tpu_custom_call.1} parent=27 // pred_check_branch
          %193 = sbr.rel (%p191) target = $region40
        $region39: #{tpu_custom_call.1} parent=27 // pred_region
          %s195 = ssub.s32 128, 128
          %196 = vsyncadd %s187, %s195
          %s197 = smul.addr %s20, 128
          %s198 = scalar_lea.hbm %s2, %s197
          %s200 = sshll.u32 %s190, 4
          %s201 = int_to_ptr.vmem [resolvable:$true] %s200
          %203 = dma.vmem_to_hbm [thread:$0]  %s201, 128, %s198, %s187
        $region40: #{tpu_custom_call.1} parent=27 // pred_fallthru
          _
      $region28: #{tpu_custom_call.1} parent=5 // pred_fallthru
        _
      %p204 = scmp.le.s32.totalorder 2, %s15
      // Predicated region
      $region41: #{tpu_custom_call.1} parent=5 // pred_check
        %p205 = pneg %p204
      $region42: #{tpu_custom_call.1} parent=5 // pred_check_branch
        %207 = sbr.rel (%p205) target = $region44
      $region43: #{tpu_custom_call.1} parent=5 // pred_region
        %s208 = ssub.s32 %s15, 2
        // Predicated region
        $region45: #{tpu_custom_call.1} parent=43 // pred_check
          %p209 = pneg %p91
        $region46: #{tpu_custom_call.1} parent=43 // pred_check_branch
          %211 = sbr.rel (%p209) target = $region48
        $region47: #{tpu_custom_call.1} parent=43 // pred_region
          %s212 = sand.u32 %s76, 1
          %s213 = scalar_lea.sflag [#allocation4], %s212
          %s214 = sand.u32 %s76, 1
          %s215 = smul.addr %s214, 8
          %s216 = scalar_lea.vmem [#allocation7], %s215
          %217 = dma.done %s213, 128
        $region48: #{tpu_custom_call.1} parent=43 // pred_fallthru
          _
      $region44: #{tpu_custom_call.1} parent=5 // pred_fallthru
        _
    $region6: #{tpu_custom_call.1} parent=1 // loop_footer
      %s19 = sadd.s32 1, %s15
    $region7: #{tpu_custom_call.1} parent=1 // loop_footer_branch
      %14 = sbr.rel target = $region3
    $region8: #{tpu_custom_call.1} parent=1 // loop_exit
      _
    %218 = vsyncpa [#allocation3], 1
    %s219 = scalar_lea.sflag [#allocation3], 1
    %220 = vsyncpa %s219, 1
    %221 = vsyncpa [#allocation4], 1
    %s222 = scalar_lea.sflag [#allocation4], 1
    %223 = vsyncpa %s222, 1
    %224 = vsyncpa [#allocation5], 1
    %s225 = scalar_lea.sflag [#allocation5], 1
    %226 = vsyncpa %s225, 1

</llo_original>
